<compile_context>
chip_gen: v6e
topology: v6e:2x2x1
jax: 0.10.0
libtpu: 0.0.40
codegen_flags: <defaults>
</compile_context>

<pallas_src>
import jax
import jax.numpy as jnp
from jax.experimental import pallas as pl
from jax.experimental.pallas import tpu as pltpu

_VMEM_LIMIT = 48 * 1024 * 1024          # <= v7x's 64 MiB physical; fine on v5e/v6e
_VMEM_BLOCK_BUDGET = 40 * 1024 * 1024   # cap on the double-buffered working set (avg)
_UNROLL_CHANNEL_LIMIT = 32              # per-channel unroll threshold for 'avg'


def _largest_aligned_divisor(g, max_elems):
    """Largest d with d | g, d % 128 == 0 and d <= max_elems (None if impossible)."""
    if g % 128 != 0:
        return None
    k_max = max(1, min(g // 128, max(1, max_elems // 128)))
    for k in range(k_max, 0, -1):
        d = 128 * k
        if g % d == 0:
            return d
    return 128


# --------------------- 'cat' / 'batch': direct HBM->HBM DMA ------------------ #

def _make_dma_concat_kernel(offsets, sizes, axis, num_pieces):
    """Issue one HBM->HBM DMA per input piece into its static output slice."""
    def kernel(*refs):
        in_refs = refs[:num_pieces]
        out_ref = refs[num_pieces]
        sem = refs[num_pieces + 1]
        copies = []
        for i in range(num_pieces):
            if axis == 1:
                dst = out_ref.at[:, pl.ds(offsets[i], sizes[i])]
            else:
                dst = out_ref.at[pl.ds(offsets[i], sizes[i]), :]
            cp = pltpu.make_async_copy(in_refs[i], dst, sem.at[i])
            cp.start()
            copies.append(cp)
        for cp in copies:       # all pieces in flight concurrently; wait at the end
            cp.wait()
    return kernel


def _dma_concat_2d(pieces, axis):
    """Concatenate 2D arrays along `axis` with one direct HBM->HBM DMA per piece."""
    if len(pieces) == 1:
        return pieces[0]
    dtype = pieces[0].dtype
    itemsize = jnp.dtype(dtype).itemsize
    sizes = [int(p.shape[axis]) for p in pieces]
    total = sum(sizes)
    other = int(pieces[0].shape[1 - axis])
    out_shape = (other, total) if axis == 1 else (total, other)

    offsets, off = [], 0
    for s in sizes:
        offsets.append(off)
        off += s

    num_pieces = len(pieces)
    n_bytes = sum(int(p.size) for p in pieces) * itemsize

    return pl.pallas_call(
        _make_dma_concat_kernel(tuple(offsets), tuple(sizes), axis, num_pieces),
        in_specs=[pl.BlockSpec(memory_space=pl.ANY)] * num_pieces,
        out_specs=pl.BlockSpec(memory_space=pl.ANY),
        out_shape=jax.ShapeDtypeStruct(out_shape, dtype),
        scratch_shapes=[pltpu.SemaphoreType.DMA((num_pieces,))],
        cost_estimate=pl.CostEstimate(flops=0, transcendentals=0,
                                      bytes_accessed=2 * n_bytes),
    )(*pieces)


# ------------------------------ 'avg' kernel -------------------------------- #

def _make_avg_kernel(inv_total_c, chans, unroll):
    """mean(cat(inputs, dim=1), dim=1) on one lane-dense spatial block."""
    def kernel(*refs):
        *in_refs, out_ref = refs
        acc = jnp.zeros(out_ref.shape, jnp.float32)
        for r, c in zip(in_refs, chans):
            if unroll:
                # Per-channel accumulation: no full-block f32 temporary, no
                # cross-sublane reduce (matters most on v5e's VPU).
                for ch in range(c):
                    acc = acc + r[:, ch, :].astype(jnp.float32)
            else:
                acc = acc + jnp.sum(r[...].astype(jnp.float32), axis=1)
        out_ref[...] = (acc * inv_total_c).astype(out_ref.dtype)
    return kernel


def concat_avg_channels(tensors):
    """torch.mean(torch.cat(feat, dim=1), dim=1, keepdim=True) for NCHW tensors."""
    n, _, h, w = (int(d) for d in tensors[0].shape)
    hw = h * w
    dtype = tensors[0].dtype
    itemsize = jnp.dtype(dtype).itemsize
    chans = [int(t.shape[1]) for t in tensors]
    c_total = sum(chans)
    pieces = [t.reshape(n, c, hw) for t, c in zip(tensors, chans)]

    # Widest lane-aligned spatial block whose double-buffered working set
    # (inputs + output, x2 buffers) stays under the VMEM budget.
    bytes_per_lane_col = 2 * n * (c_total + 1) * itemsize
    max_elems = max(128, _VMEM_BLOCK_BUDGET // max(1, bytes_per_lane_col))
    w_blk = _largest_aligned_divisor(hw, max_elems) or hw  # full-HW block always legal
    # TODO(synk): if H*W is both huge and not a multiple of 128, the full-HW
    # fallback block may exceed VMEM; such shapes would need an Element-indexed
    # tail block.
    grid = (hw // w_blk,)

    unroll = c_total <= _UNROLL_CHANNEL_LIMIT
    in_bytes = n * c_total * hw * itemsize
    out_bytes = n * hw * itemsize

    out2d = pl.pallas_call(
        _make_avg_kernel(1.0 / c_total, chans, unroll),
        grid=grid,
        in_specs=[pl.BlockSpec((n, c, w_blk), (lambda j: (0, 0, j)))
                  for c in chans],
        out_specs=pl.BlockSpec((n, w_blk), lambda j: (0, j)),
        out_shape=jax.ShapeDtypeStruct((n, hw), dtype),
        compiler_params=pltpu.CompilerParams(
            dimension_semantics=("parallel",),
            vmem_limit_bytes=_VMEM_LIMIT,
        ),
        cost_estimate=pl.CostEstimate(flops=n * c_total * hw,
                                      transcendentals=0,
                                      bytes_accessed=in_bytes + out_bytes),
    )(*pieces)
    return out2d.reshape(n, 1, h, w)


# ----------------------------- mode wrappers -------------------------------- #

def concat_channels(tensors):
    """torch.cat(feat, dim=1) for NCHW tensors (same N, H, W)."""
    n, _, h, w = (int(d) for d in tensors[0].shape)
    hw = h * w
    pieces = [t.reshape(n, int(t.shape[1]) * hw) for t in tensors]
    out2d = _dma_concat_2d(pieces, axis=1)
    return out2d.reshape(n, -1, h, w)


def concat_batch(tensors):
    """torch.cat(feat, dim=0) for NCHW tensors (same C, H, W)."""
    _, c, h, w = (int(d) for d in tensors[0].shape)
    chw = c * h * w
    pieces = [t.reshape(int(t.shape[0]), chw) for t in tensors]
    out2d = _dma_concat_2d(pieces, axis=0)
    return out2d.reshape(-1, c, h, w)


class ConcatLayer:
    """JAX/Pallas equivalent of the PyTorch Concat_Layer (no parameters)."""

    def __init__(self, layer_name, config):
        self.layer_name = layer_name
        self.mode = config['mode']
        self.layers = config['layers']

    def forward(self, feats):
        feat = [feats[i] for i in self.layers]
        if self.mode == 'cat':
            feats.update({self.layer_name: concat_channels(feat)})
        elif self.mode == 'avg':
            feats.update({self.layer_name: concat_avg_channels(feat)})
        elif self.mode == 'batch':
            feats.update({self.layer_name: concat_batch(feat)})
        return feats


# ------------------------------- demo -------------------------------------- #

if __name__ == "__main__":
    key = jax.random.PRNGKey(0)
    k0, k1, k2 = jax.random.split(key, 3)

    x0 = jax.random.normal(k0, (2, 4, 16, 16), dtype=jnp.float32)
    x1 = jax.random.normal(k1, (2, 6, 16, 16), dtype=jnp.float32)
    x2 = jax.random.normal(k2, (2, 2, 16, 16), dtype=jnp.float32)

    feats = {'l0': x0, 'l1': x1, 'l2': x2}

    # mode = 'cat'
    cat_layer = ConcatLayer('cat_out', {'mode': 'cat', 'layers': ['l0', 'l1', 'l2']})
    feats = cat_layer.forward(feats)
    cat_out = jax.block_until_ready(feats['cat_out'])
    cat_ref = jnp.concatenate([x0, x1, x2], axis=1)
    assert cat_out.shape == (2, 12, 16, 16)
    assert jnp.allclose(cat_out, cat_ref)

    # mode = 'avg'
    avg_layer = ConcatLayer('avg_out', {'mode': 'avg', 'layers': ['l0', 'l1', 'l2']})
    feats = avg_layer.forward(feats)
    avg_out = jax.block_until_ready(feats['avg_out'])
    avg_ref = jnp.mean(jnp.concatenate([x0, x1, x2], axis=1), axis=1, keepdims=True)
    assert avg_out.shape == (2, 1, 16, 16)
    assert jnp.allclose(avg_out, avg_ref, atol=1e-5)

    # mode = 'batch' (inputs share C, H, W)
    y0 = x0
    y1 = jax.random.normal(jax.random.PRNGKey(1), (3, 4, 16, 16), dtype=jnp.float32)
    feats2 = {'a': y0, 'b': y1}
    batch_layer = ConcatLayer('batch_out', {'mode': 'batch', 'layers': ['a', 'b']})
    feats2 = batch_layer.forward(feats2)
    batch_out = jax.block_until_ready(feats2['batch_out'])
    batch_ref = jnp.concatenate([y0, y1], axis=0)
    assert batch_out.shape == (5, 4, 16, 16)
    assert jnp.allclose(batch_out, batch_ref)

    print("KERNEL_OK")
</pallas_src>

<mosaic_0001>
module attributes {stable_mosaic.version = 11 : i64} {
  func.func @kernel(%arg0: memref<2x1024xf32, #tpu.memory_space<any>>, %arg1: memref<2x1536xf32, #tpu.memory_space<any>>, %arg2: memref<2x512xf32, #tpu.memory_space<any>>, %arg3: memref<2x3072xf32, #tpu.memory_space<any>>, %arg4: memref<3x!tpu.dma_semaphore, #tpu.memory_space<semaphore_mem>>) attributes {dimension_semantics = [], scalar_prefetch = 0 : i64, scratch_operands = 1 : i64, tpu.core_type = #tpu.core_type<tc>} {
    %c0_i32 = arith.constant 0 : i32
    %c0_i32_0 = arith.constant 0 : i32
    %c0_i32_1 = arith.constant 0 : i32
    %0 = tpu.memref_slice %arg3[%c0_i32_0, %c0_i32_1] : memref<2x3072xf32, #tpu.memory_space<any>> -> memref<2x1024xf32, #tpu.memory_space<any>>
    %1 = tpu.memref_slice %arg4[%c0_i32] : memref<3x!tpu.dma_semaphore, #tpu.memory_space<semaphore_mem>> -> memref<1x!tpu.dma_semaphore, #tpu.memory_space<semaphore_mem>>
    %2 = tpu.memref_squeeze %1 : memref<1x!tpu.dma_semaphore, #tpu.memory_space<semaphore_mem>> -> memref<!tpu.dma_semaphore, #tpu.memory_space<semaphore_mem>>
    tpu.enqueue_dma source(%arg0 : memref<2x1024xf32, #tpu.memory_space<any>>) target(%0 : memref<2x1024xf32, #tpu.memory_space<any>>) target_semaphore(%2 : memref<!tpu.dma_semaphore, #tpu.memory_space<semaphore_mem>>)
    %c1_i32 = arith.constant 1 : i32
    %c0_i32_2 = arith.constant 0 : i32
    %c1024_i32 = arith.constant 1024 : i32
    %3 = tpu.memref_slice %arg3[%c0_i32_2, %c1024_i32] : memref<2x3072xf32, #tpu.memory_space<any>> -> memref<2x1536xf32, #tpu.memory_space<any>>
    %4 = tpu.memref_slice %arg4[%c1_i32] : memref<3x!tpu.dma_semaphore, #tpu.memory_space<semaphore_mem>> -> memref<1x!tpu.dma_semaphore, #tpu.memory_space<semaphore_mem>>
    %5 = tpu.memref_squeeze %4 : memref<1x!tpu.dma_semaphore, #tpu.memory_space<semaphore_mem>> -> memref<!tpu.dma_semaphore, #tpu.memory_space<semaphore_mem>>
    tpu.enqueue_dma source(%arg1 : memref<2x1536xf32, #tpu.memory_space<any>>) target(%3 : memref<2x1536xf32, #tpu.memory_space<any>>) target_semaphore(%5 : memref<!tpu.dma_semaphore, #tpu.memory_space<semaphore_mem>>)
    %c2_i32 = arith.constant 2 : i32
    %c0_i32_3 = arith.constant 0 : i32
    %c2560_i32 = arith.constant 2560 : i32
    %6 = tpu.memref_slice %arg3[%c0_i32_3, %c2560_i32] : memref<2x3072xf32, #tpu.memory_space<any>> -> memref<2x512xf32, #tpu.memory_space<any>>
    %7 = tpu.memref_slice %arg4[%c2_i32] : memref<3x!tpu.dma_semaphore, #tpu.memory_space<semaphore_mem>> -> memref<1x!tpu.dma_semaphore, #tpu.memory_space<semaphore_mem>>
    %8 = tpu.memref_squeeze %7 : memref<1x!tpu.dma_semaphore, #tpu.memory_space<semaphore_mem>> -> memref<!tpu.dma_semaphore, #tpu.memory_space<semaphore_mem>>
    tpu.enqueue_dma source(%arg2 : memref<2x512xf32, #tpu.memory_space<any>>) target(%6 : memref<2x512xf32, #tpu.memory_space<any>>) target_semaphore(%8 : memref<!tpu.dma_semaphore, #tpu.memory_space<semaphore_mem>>)
    %c0_i32_4 = arith.constant 0 : i32
    %c0_i32_5 = arith.constant 0 : i32
    %c0_i32_6 = arith.constant 0 : i32
    %9 = tpu.memref_slice %arg3[%c0_i32_5, %c0_i32_6] : memref<2x3072xf32, #tpu.memory_space<any>> -> memref<2x1024xf32, #tpu.memory_space<any>>
    %10 = tpu.memref_slice %arg4[%c0_i32_4] : memref<3x!tpu.dma_semaphore, #tpu.memory_space<semaphore_mem>> -> memref<1x!tpu.dma_semaphore, #tpu.memory_space<semaphore_mem>>
    %11 = tpu.memref_squeeze %10 : memref<1x!tpu.dma_semaphore, #tpu.memory_space<semaphore_mem>> -> memref<!tpu.dma_semaphore, #tpu.memory_space<semaphore_mem>>
    tpu.wait_dma2 semaphore(%11 : memref<!tpu.dma_semaphore, #tpu.memory_space<semaphore_mem>>) src(%arg0 : memref<2x1024xf32, #tpu.memory_space<any>>) dst(%9 : memref<2x1024xf32, #tpu.memory_space<any>>)
    %c1_i32_7 = arith.constant 1 : i32
    %c0_i32_8 = arith.constant 0 : i32
    %c1024_i32_9 = arith.constant 1024 : i32
    %12 = tpu.memref_slice %arg3[%c0_i32_8, %c1024_i32_9] : memref<2x3072xf32, #tpu.memory_space<any>> -> memref<2x1536xf32, #tpu.memory_space<any>>
    %13 = tpu.memref_slice %arg4[%c1_i32_7] : memref<3x!tpu.dma_semaphore, #tpu.memory_space<semaphore_mem>> -> memref<1x!tpu.dma_semaphore, #tpu.memory_space<semaphore_mem>>
    %14 = tpu.memref_squeeze %13 : memref<1x!tpu.dma_semaphore, #tpu.memory_space<semaphore_mem>> -> memref<!tpu.dma_semaphore, #tpu.memory_space<semaphore_mem>>
    tpu.wait_dma2 semaphore(%14 : memref<!tpu.dma_semaphore, #tpu.memory_space<semaphore_mem>>) src(%arg1 : memref<2x1536xf32, #tpu.memory_space<any>>) dst(%12 : memref<2x1536xf32, #tpu.memory_space<any>>)
    %c2_i32_10 = arith.constant 2 : i32
    %c0_i32_11 = arith.constant 0 : i32
    %c2560_i32_12 = arith.constant 2560 : i32
    %15 = tpu.memref_slice %arg3[%c0_i32_11, %c2560_i32_12] : memref<2x3072xf32, #tpu.memory_space<any>> -> memref<2x512xf32, #tpu.memory_space<any>>
    %16 = tpu.memref_slice %arg4[%c2_i32_10] : memref<3x!tpu.dma_semaphore, #tpu.memory_space<semaphore_mem>> -> memref<1x!tpu.dma_semaphore, #tpu.memory_space<semaphore_mem>>
    %17 = tpu.memref_squeeze %16 : memref<1x!tpu.dma_semaphore, #tpu.memory_space<semaphore_mem>> -> memref<!tpu.dma_semaphore, #tpu.memory_space<semaphore_mem>>
    tpu.wait_dma2 semaphore(%17 : memref<!tpu.dma_semaphore, #tpu.memory_space<semaphore_mem>>) src(%arg2 : memref<2x512xf32, #tpu.memory_space<any>>) dst(%15 : memref<2x512xf32, #tpu.memory_space<any>>)
    return
  }
}

</mosaic_0001>

<llo_original>
// kernel: tpu_custom_call.1
$region0: #{tpu_custom_call.1}
  #allocation0 [shape = 'u32[]', space=smem, size = 0x4, offset = 0x4, fixed_abs, tag = 'smem constant byte address 0x4 - core index']
  #allocation1 [shape = 'u32[144,128]{1,0:T(1,128)}', space=vmem, size = 0x12000, scoped, tag = 'internal scratch']
  #allocation2 [shape = 's32[3]{0}', space=sflag, size = 0xc, scoped, tag = 'scratch operand']
  #allocation3 [shape = 's32[]', space=sflag, size = 0x4, offset = 0, fixed_abs, tag = 'sflag constant byte address 0x0 - dummy sync flag']
  #allocation4 [shape = 'u32[0]{0}', space=smem, size = 0, offset = 0, fixed_abs, tag = 'smem constant byte address 0x0 - null']
  #allocation5 [shape = 's32[]', space=sflag, size = 0x4, offset = 0, fixed_abs, tag = 'sflag constant byte address 0x0 - dummy sync flag']
  #allocation6 [shape = 'u32[0]{0}', space=smem, size = 0, offset = 0, fixed_abs, tag = 'smem constant byte address 0x0 - null']
  #allocation7 [shape = 's32[]', space=sflag, size = 0x4, offset = 0, fixed_abs, tag = 'sflag constant byte address 0x0 - dummy sync flag']
  #allocation8 [shape = 'u32[0]{0}', space=smem, size = 0, offset = 0, fixed_abs, tag = 'smem constant byte address 0x0 - null']
  %s0 = inlined_call_operand.hbm [shape: f32[2,1024], index: 0, kind: input, shape index: {}]
  %s1 = inlined_call_operand.hbm [shape: f32[2,1536], index: 1, kind: input, shape index: {}]
  %s2 = inlined_call_operand.hbm [shape: f32[2,512], index: 2, kind: input, shape index: {}]
  %s3 = inlined_call_operand.hbm [shape: f32[2,3072], index: 3, kind: output, shape index: {}]
  %s4 = sld [smem:[#allocation0]]
  $region2: #{tpu_custom_call.1} parent=0
    _
  %s6 = ssub.s32 1, %s4
  %s7 = scalar_select 0, %s6, %s4
  %s9 = sshll.u32 1, 14
  %s10 = sxor.u32 4294967295, %s9
  %14 = dma.general %s0, 256, %s3, [#allocation2], 131072, [#allocation4], 0, 0
  %s15 = scalar_lea.hbm %s3, 256
  %s16 = scalar_lea.sflag [#allocation2], 1
  %s18 = sshll.u32 1, 14
  %s19 = sxor.u32 4294967295, %s18
  %23 = dma.general %s1, 384, %s15, %s16, 131072, [#allocation6], 0, 0
  %s24 = scalar_lea.hbm %s3, 640
  %s25 = scalar_lea.sflag [#allocation2], 2
  %s27 = sshll.u32 1, 14
  %s28 = sxor.u32 4294967295, %s27
  %32 = dma.general %s2, 128, %s24, %s25, 131072, [#allocation8], 0, 0
  %s33 = smul.u32 2, 1
  %s34 = smul.u32 %s33, 8
  %s35 = sshll.u32 %s34, 4
  %36 = dma.done [#allocation2], %s35
  %s37 = smul.u32 %s33, 12
  %s38 = sshll.u32 %s37, 4
  %39 = dma.done %s16, %s38
  %s40 = smul.u32 %s33, 4
  %s41 = sshll.u32 %s40, 4
  %42 = dma.done %s25, %s41
  %43 = vsyncmov [#allocation2]
  %s44 = vpop.sfrf %43
  %p45 = scmp.eq.s32.totalorder %s44, 0
  %p46 = pneg %p45
  %48 = shalt.err (%p46)
  %s49 = scalar_lea.sflag [#allocation2], 1
  %50 = vsyncmov %s49
  %s51 = vpop.sfrf %50
  %p52 = scmp.eq.s32.totalorder %s51, 0
  %p53 = pneg %p52
  %55 = shalt.err (%p53)
  %s56 = scalar_lea.sflag [#allocation2], 2
  %57 = vsyncmov %s56
  %s58 = vpop.sfrf %57
  %p59 = scmp.eq.s32.totalorder %s58, 0
  %p60 = pneg %p59
  %62 = shalt.err (%p60)

</llo_original>
